<compile_context>
chip_gen: v5e
topology: v5e:2x2
jax: 0.10.0
libtpu: 0.0.40
codegen_flags: <defaults>
</compile_context>

<pallas_src>
import functools

import jax
import jax.numpy as jnp
from jax.experimental import pallas as pl
from jax.experimental.pallas import tpu as pltpu

LANE = 128
SUBLANE = 8


def _round_up(v, m):
    return (v + m - 1) // m * m


def _mlp_kernel(x_ref, w1_ref, b1_ref, w2_ref, b2_ref, w3_ref, b3_ref, out_ref, *, out_dim):
    """Fused MLP forward for one batch tile: (Linear+ReLU) x2 -> Linear.

    Weights arrive in bf16 (BN already folded); activations/bias/ReLU in f32;
    all matmuls accumulate in f32 on the MXU.  The final layer is computed on the
    lane-padded (128-col) weights held in VMEM, and only the true out_dim columns
    are stored to the (un-padded) output ref.
    """
    x = x_ref[...].astype(jnp.bfloat16)

    # Layer 1: Linear (BN folded) -> ReLU     (Dropout = identity in eval)
    h1 = jnp.dot(x, w1_ref[...], preferred_element_type=jnp.float32) + b1_ref[...]
    h1 = jnp.maximum(h1, 0.0)

    # Layer 2: Linear (BN folded) -> ReLU     (Dropout = identity in eval)
    h2 = jnp.dot(h1.astype(jnp.bfloat16), w2_ref[...],
                 preferred_element_type=jnp.float32) + b2_ref[...]
    h2 = jnp.maximum(h2, 0.0)

    # Output layer: Linear only.  Matmul on VMEM-padded columns, store only out_dim.
    out = jnp.dot(h2.astype(jnp.bfloat16), w3_ref[...],
                  preferred_element_type=jnp.float32) + b3_ref[...]
    out_ref[...] = out[:, :out_dim].astype(out_ref.dtype)


@functools.partial(jax.jit, static_argnames=("out_dim", "tb"))
def neural_network_forward(x, kparams, out_dim, tb=4096):
    """Run the fused Pallas kernel.

    x:        (batch, input_dim) float32 (or bfloat16, used as-is)
    kparams:  dict from prepare_params() (BN-folded bf16 weights, f32 biases,
              final layer lane-padded to 128 columns for VMEM only)
    out_dim:  true output dimension (static)
    tb:       max batch tile size (static); rows per grid step.
    """
    batch, in_dim = x.shape
    w1, b1 = kparams["w1"], kparams["b1"]
    w2, b2 = kparams["w2"], kparams["b2"]
    w3, b3 = kparams["w3"], kparams["b3"]
    h1_dim, h2_dim, out_pad = w1.shape[1], w2.shape[1], w3.shape[1]

    # Batch tile:
    #  * multiple of 8 sublanes (f32)
    #  * capped so the grid has >= MIN_TILES steps when batch allows it
    #    (keeps both v7x TensorCores fed and the pipeline primed)
    #  * this also makes the tile divide common batch sizes, so the x pre-pad
    #    usually degenerates to a no-op.
    MIN_TILES = 4
    cap = _round_up(max(pl.cdiv(batch, MIN_TILES), SUBLANE), SUBLANE)
    tb_eff = _round_up(min(max(tb, SUBLANE), cap), SUBLANE)
    padded_batch = _round_up(batch, tb_eff)
    if padded_batch != batch:
        x = jnp.pad(x, ((0, padded_batch - batch), (0, 0)))
    grid = (padded_batch // tb_eff,)

    x_spec = pl.BlockSpec((tb_eff, in_dim), lambda i: (i, 0))
    out_spec = pl.BlockSpec((tb_eff, out_dim), lambda i: (i, 0))  # last dim == full dim

    def const_spec(shape):
        # Full-array block with a constant index_map: stays VMEM-resident across steps.
        return pl.BlockSpec(shape, lambda i: (0, 0))

    flops = 2 * padded_batch * (in_dim * h1_dim + h1_dim * h2_dim + h2_dim * out_pad)
    bytes_accessed = (padded_batch * in_dim * x.dtype.itemsize
                      + padded_batch * out_dim * 4
                      + (w1.size + w2.size + w3.size) * 2
                      + (b1.size + b2.size + b3.size) * 4)

    kernel = functools.partial(_mlp_kernel, out_dim=out_dim)

    out = pl.pallas_call(
        kernel,
        out_shape=jax.ShapeDtypeStruct((padded_batch, out_dim), jnp.float32),
        grid_spec=pltpu.PrefetchScalarGridSpec(
            num_scalar_prefetch=0,
            grid=grid,
            in_specs=[
                x_spec,
                const_spec(w1.shape), const_spec(b1.shape),
                const_spec(w2.shape), const_spec(b2.shape),
                const_spec(w3.shape), const_spec(b3.shape),
            ],
            out_specs=out_spec,
        ),
        compiler_params=pltpu.CompilerParams(
            dimension_semantics=("parallel",),   # v7x megacore sharding; measured no-op on v5e/v6e
            vmem_limit_bytes=32 * 1024 * 1024,   # per-step blocks are small; safe on v7x (64 MiB phys)
        ),
        cost_estimate=pl.CostEstimate(
            flops=flops, transcendentals=0, bytes_accessed=bytes_accessed),
    )(x, w1, b1, w2, b2, w3, b3)

    return out[:batch, :]


def init_params(key, input_dim, hidden_dims, output_dim):
    """Raw (PyTorch-style) parameters, f32, with non-trivial BN running stats.

    Linear: weight/bias ~ U(-1/sqrt(fan_in), 1/sqrt(fan_in)) stored as (in, out) = W.T.
    BatchNorm1d: gamma/beta/running_mean/running_var randomized to exercise the fold.
    """
    dims = [input_dim] + list(hidden_dims) + [output_dim]
    n_layers = len(dims) - 1
    keys = iter(jax.random.split(key, 6 * n_layers))
    raw = {}
    for li in range(n_layers):
        fan_in, fan_out = dims[li], dims[li + 1]
        bound = float(fan_in) ** -0.5
        raw[f"w{li + 1}"] = jax.random.uniform(
            next(keys), (fan_in, fan_out), minval=-bound, maxval=bound, dtype=jnp.float32)
        raw[f"b{li + 1}"] = jax.random.uniform(
            next(keys), (1, fan_out), minval=-bound, maxval=bound, dtype=jnp.float32)
        if li < n_layers - 1:  # hidden layers carry BatchNorm
            raw[f"gamma{li + 1}"] = 1.0 + 0.2 * jax.random.normal(next(keys), (1, fan_out), jnp.float32)
            raw[f"beta{li + 1}"] = 0.1 * jax.random.normal(next(keys), (1, fan_out), jnp.float32)
            raw[f"mean{li + 1}"] = 0.1 * jax.random.normal(next(keys), (1, fan_out), jnp.float32)
            raw[f"var{li + 1}"] = jax.random.uniform(
                next(keys), (1, fan_out), minval=0.5, maxval=1.5, dtype=jnp.float32)
    return raw


def prepare_params(raw, eps=1e-5):
    """Parameter glue: fold eval-mode BN into the Linears, cast weights to bf16.

    The final layer is zero-padded to a lane-dense multiple of 128 columns for its
    VMEM-resident copy only (the padded columns never reach HBM output)."""
    s1 = raw["gamma1"] / jnp.sqrt(raw["var1"] + eps)
    t1 = raw["beta1"] - raw["mean1"] * s1
    s2 = raw["gamma2"] / jnp.sqrt(raw["var2"] + eps)
    t2 = raw["beta2"] - raw["mean2"] * s2

    out_dim = raw["w3"].shape[1]
    out_pad = _round_up(out_dim, LANE)

    kparams = {
        "w1": (raw["w1"] * s1).astype(jnp.bfloat16),
        "b1": (raw["b1"] * s1 + t1).astype(jnp.float32),
        "w2": (raw["w2"] * s2).astype(jnp.bfloat16),
        "b2": (raw["b2"] * s2 + t2).astype(jnp.float32),
        "w3": jnp.pad(raw["w3"], ((0, 0), (0, out_pad - out_dim))).astype(jnp.bfloat16),
        "b3": jnp.pad(raw["b3"], ((0, 0), (0, out_pad - out_dim))).astype(jnp.float32),
    }
    return kparams, out_dim


def reference_forward(x, raw, eps=1e-5):
    """Pure-JAX f32 reference with explicit (un-folded) eval-mode BatchNorm."""
    h = x @ raw["w1"] + raw["b1"]
    h = (h - raw["mean1"]) / jnp.sqrt(raw["var1"] + eps) * raw["gamma1"] + raw["beta1"]
    h = jnp.maximum(h, 0.0)
    h = h @ raw["w2"] + raw["b2"]
    h = (h - raw["mean2"]) / jnp.sqrt(raw["var2"] + eps) * raw["gamma2"] + raw["beta2"]
    h = jnp.maximum(h, 0.0)
    return h @ raw["w3"] + raw["b3"]


if __name__ == "__main__":
    # Small shapes consistent with the module: tabular features -> MLP (config defaults).
    input_dim = 16
    hidden_dims = [64, 32]   # config default 'hidden_dims'
    output_dim = 4

    key = jax.random.PRNGKey(0)
    pkey, xkey, xkey2 = jax.random.split(key, 3)
    raw = init_params(pkey, input_dim, hidden_dims, output_dim)
    kparams, out_dim = prepare_params(raw)

    # Case 1: batch divisible into >= 4 tiles (tb cap -> tile 16, grid (4,), no padding).
    batch = 64
    x = jax.random.normal(xkey, (batch, input_dim), dtype=jnp.float32)
    out = jax.block_until_ready(neural_network_forward(x, kparams, out_dim))
    ref = reference_forward(x, raw)
    assert out.shape == (batch, output_dim), out.shape
    max_err = float(jnp.max(jnp.abs(out - ref)))
    # bf16 matmul operands (f32 accumulate) -> loosened tolerance vs f32 reference.
    assert jnp.allclose(out, ref, atol=3e-2, rtol=3e-2), f"mismatch vs reference (max abs err {max_err})"

    # Case 2: ragged batch (exercises the minimal pad + row-slice path).
    batch2 = 36
    x2 = jax.random.normal(xkey2, (batch2, input_dim), dtype=jnp.float32)
    out2 = jax.block_until_ready(neural_network_forward(x2, kparams, out_dim))
    ref2 = reference_forward(x2, raw)
    assert out2.shape == (batch2, output_dim), out2.shape
    max_err2 = float(jnp.max(jnp.abs(out2 - ref2)))
    assert jnp.allclose(out2, ref2, atol=3e-2, rtol=3e-2), f"mismatch vs reference (max abs err {max_err2})"

    print("KERNEL_OK")
</pallas_src>

<mosaic_0001>
module attributes {stable_mosaic.version = 11 : i64} {
  func.func @_mlp_kernel(%arg0: i32, %arg1: memref<16x16xf32, #tpu.memory_space<vmem>>, %arg2: memref<16x64xbf16, #tpu.memory_space<vmem>>, %arg3: memref<1x64xf32, #tpu.memory_space<vmem>>, %arg4: memref<64x32xbf16, #tpu.memory_space<vmem>>, %arg5: memref<1x32xf32, #tpu.memory_space<vmem>>, %arg6: memref<32x128xbf16, #tpu.memory_space<vmem>>, %arg7: memref<1x128xf32, #tpu.memory_space<vmem>>, %arg8: memref<16x4xf32, #tpu.memory_space<vmem>>) attributes {dimension_semantics = [#tpu.dimension_semantics<parallel>], iteration_bounds = array<i64: 4>, scalar_prefetch = 0 : i64, scratch_operands = 0 : i64, tpu.core_type = #tpu.core_type<tc>, window_params = [{transform_indices = @transform_0, window_bounds = array<i64: 16, 16>}, {pipeline_mode = #tpu.pipeline_mode<synchronous>, transform_indices = @transform_1, window_bounds = array<i64: 16, 64>}, {pipeline_mode = #tpu.pipeline_mode<synchronous>, transform_indices = @transform_2, window_bounds = array<i64: 1, 64>}, {pipeline_mode = #tpu.pipeline_mode<synchronous>, transform_indices = @transform_3, window_bounds = array<i64: 64, 32>}, {pipeline_mode = #tpu.pipeline_mode<synchronous>, transform_indices = @transform_4, window_bounds = array<i64: 1, 32>}, {pipeline_mode = #tpu.pipeline_mode<synchronous>, transform_indices = @transform_5, window_bounds = array<i64: 32, 128>}, {pipeline_mode = #tpu.pipeline_mode<synchronous>, transform_indices = @transform_6, window_bounds = array<i64: 1, 128>}, {transform_indices = @transform_7, window_bounds = array<i64: 16, 4>}]} {
    %c0 = arith.constant 0 : index
    %c0_0 = arith.constant 0 : index
    %0 = vector.load %arg1[%c0, %c0_0] : memref<16x16xf32, #tpu.memory_space<vmem>>, vector<16x16xf32>
    %1 = arith.truncf %0 : vector<16x16xf32> to vector<16x16xbf16>
    %c0_1 = arith.constant 0 : index
    %c0_2 = arith.constant 0 : index
    %2 = vector.load %arg2[%c0_1, %c0_2] : memref<16x64xbf16, #tpu.memory_space<vmem>>, vector<16x64xbf16>
    %cst = arith.constant dense<0.000000e+00> : vector<16x64xf32>
    %3 = tpu.matmul %1, %2, %cst {dimension_numbers = #tpu.dot_dimension_numbers<[1], [0], [0], [1], [0, 0, 1, 1], [], []>} : vector<16x16xbf16>, vector<16x64xbf16>, vector<16x64xf32> -> vector<16x64xf32>
    %c0_3 = arith.constant 0 : index
    %c0_4 = arith.constant 0 : index
    %4 = vector.load %arg3[%c0_3, %c0_4] : memref<1x64xf32, #tpu.memory_space<vmem>>, vector<1x64xf32>
    %5 = vector.broadcast %4 : vector<1x64xf32> to vector<16x64xf32>
    %6 = arith.addf %3, %5 : vector<16x64xf32>
    %cst_5 = arith.constant 0.000000e+00 : f32
    %7 = vector.broadcast %cst_5 : f32 to vector<16x64xf32>
    %8 = arith.maximumf %6, %7 : vector<16x64xf32>
    %9 = arith.truncf %8 : vector<16x64xf32> to vector<16x64xbf16>
    %c0_6 = arith.constant 0 : index
    %c0_7 = arith.constant 0 : index
    %10 = vector.load %arg4[%c0_6, %c0_7] : memref<64x32xbf16, #tpu.memory_space<vmem>>, vector<64x32xbf16>
    %cst_8 = arith.constant dense<0.000000e+00> : vector<16x32xf32>
    %11 = tpu.matmul %9, %10, %cst_8 {dimension_numbers = #tpu.dot_dimension_numbers<[1], [0], [0], [1], [0, 0, 1, 1], [], []>} : vector<16x64xbf16>, vector<64x32xbf16>, vector<16x32xf32> -> vector<16x32xf32>
    %c0_9 = arith.constant 0 : index
    %c0_10 = arith.constant 0 : index
    %12 = vector.load %arg5[%c0_9, %c0_10] : memref<1x32xf32, #tpu.memory_space<vmem>>, vector<1x32xf32>
    %13 = vector.broadcast %12 : vector<1x32xf32> to vector<16x32xf32>
    %14 = arith.addf %11, %13 : vector<16x32xf32>
    %cst_11 = arith.constant 0.000000e+00 : f32
    %15 = vector.broadcast %cst_11 : f32 to vector<16x32xf32>
    %16 = arith.maximumf %14, %15 : vector<16x32xf32>
    %17 = arith.truncf %16 : vector<16x32xf32> to vector<16x32xbf16>
    %c0_12 = arith.constant 0 : index
    %c0_13 = arith.constant 0 : index
    %18 = vector.load %arg6[%c0_12, %c0_13] : memref<32x128xbf16, #tpu.memory_space<vmem>>, vector<32x128xbf16>
    %cst_14 = arith.constant dense<0.000000e+00> : vector<16x128xf32>
    %19 = tpu.matmul %17, %18, %cst_14 {dimension_numbers = #tpu.dot_dimension_numbers<[1], [0], [0], [1], [0, 0, 1, 1], [], []>} : vector<16x32xbf16>, vector<32x128xbf16>, vector<16x128xf32> -> vector<16x128xf32>
    %c0_15 = arith.constant 0 : index
    %c0_16 = arith.constant 0 : index
    %20 = vector.load %arg7[%c0_15, %c0_16] : memref<1x128xf32, #tpu.memory_space<vmem>>, vector<1x128xf32>
    %21 = vector.broadcast %20 : vector<1x128xf32> to vector<16x128xf32>
    %22 = arith.addf %19, %21 : vector<16x128xf32>
    %23 = vector.extract_strided_slice %22 {offsets = [0, 0], sizes = [16, 4], strides = [1, 1]} : vector<16x128xf32> to vector<16x4xf32>
    %c0_17 = arith.constant 0 : index
    %c0_18 = arith.constant 0 : index
    %24 = vector.load %arg8[%c0_17, %c0_18] : memref<16x4xf32, #tpu.memory_space<vmem>>, vector<16x4xf32>
    tpu.vector_store %arg8[%c0_17, %c0_18], %23 {strides = array<i32>} : memref<16x4xf32, #tpu.memory_space<vmem>>, vector<16x4xf32>,
    return
  }
  func.func @transform_0(%arg0: i32) -> (i32, i32) {
    %c0_i32 = arith.constant 0 : i32
    %c0_i32_0 = arith.constant 0 : i32
    return %arg0, %c0_i32 : i32, i32
  }
  func.func @transform_1(%arg0: i32) -> (i32, i32) {
    %c0_i32 = arith.constant 0 : i32
    %c0_i32_0 = arith.constant 0 : i32
    %c0_i32_1 = arith.constant 0 : i32
    return %c0_i32, %c0_i32_0 : i32, i32
  }
  func.func @transform_2(%arg0: i32) -> (i32, i32) {
    %c0_i32 = arith.constant 0 : i32
    %c0_i32_0 = arith.constant 0 : i32
    %c0_i32_1 = arith.constant 0 : i32
    return %c0_i32, %c0_i32_0 : i32, i32
  }
  func.func @transform_3(%arg0: i32) -> (i32, i32) {
    %c0_i32 = arith.constant 0 : i32
    %c0_i32_0 = arith.constant 0 : i32
    %c0_i32_1 = arith.constant 0 : i32
    return %c0_i32, %c0_i32_0 : i32, i32
  }
  func.func @transform_4(%arg0: i32) -> (i32, i32) {
    %c0_i32 = arith.constant 0 : i32
    %c0_i32_0 = arith.constant 0 : i32
    %c0_i32_1 = arith.constant 0 : i32
    return %c0_i32, %c0_i32_0 : i32, i32
  }
  func.func @transform_5(%arg0: i32) -> (i32, i32) {
    %c0_i32 = arith.constant 0 : i32
    %c0_i32_0 = arith.constant 0 : i32
    %c0_i32_1 = arith.constant 0 : i32
    return %c0_i32, %c0_i32_0 : i32, i32
  }
  func.func @transform_6(%arg0: i32) -> (i32, i32) {
    %c0_i32 = arith.constant 0 : i32
    %c0_i32_0 = arith.constant 0 : i32
    %c0_i32_1 = arith.constant 0 : i32
    return %c0_i32, %c0_i32_0 : i32, i32
  }
  func.func @transform_7(%arg0: i32) -> (i32, i32) {
    %c0_i32 = arith.constant 0 : i32
    %c0_i32_0 = arith.constant 0 : i32
    return %arg0, %c0_i32 : i32, i32
  }
}

</mosaic_0001>

<llo_original>
// kernel: neural_network_forward.1
$region0: #{neural_network_forward.1}
  #allocation0 [shape = 'u32[]', space=smem, size = 0x4, offset = 0x4, fixed_abs, tag = 'smem constant byte address 0x4 - core index']
  #allocation1 [shape = 'u32[72,128]{1,0:T(1,128)}', space=vmem, size = 0x9000, scoped, tag = 'internal scratch']
  %s0 = inlined_call_operand.vmem [shape: f32[64,16], index: 0, kind: input, shape index: {}]
  %s1 = inlined_call_operand.vmem [shape: bf16[16,64], index: 1, kind: input, shape index: {}]
  %s2 = inlined_call_operand.vmem [shape: f32[1,64], index: 2, kind: input, shape index: {}]
  %s3 = inlined_call_operand.vmem [shape: bf16[64,32], index: 3, kind: input, shape index: {}]
  %s4 = inlined_call_operand.vmem [shape: f32[1,32], index: 4, kind: input, shape index: {}]
  %s5 = inlined_call_operand.vmem [shape: bf16[32,128], index: 5, kind: input, shape index: {}]
  %s6 = inlined_call_operand.vmem [shape: f32[1,128], index: 6, kind: input, shape index: {}]
  %s7 = inlined_call_operand.vmem [shape: f32[64,4], index: 7, kind: output, shape index: {}]
  %s8 = sld [smem:[#allocation0]]
  $region61: #{neural_network_forward.1} parent=0
    _
  %s10 = ssub.s32 1, %s8
  %s11 = scalar_select 0, %s10, %s8
  loop: start=0, step=1, limit=6
  $region2: #{neural_network_forward.1} parent=0 // loop_pre_header
    _
  $region3: #{neural_network_forward.1} parent=0 // loop_header
    %s13 = sphi 0, %s17
    %p14 = scmp.ge.s32.totalorder %s13, 6
    %s23 = sphi 0, %s25
    %s26 = sphi 0, %s23
    %s27 = sphi 0, %s26
    %s43 = sphi 0, %s27
    %s47 = sphi 0, %s47
    %s49 = sphi 0, %s47
    %s50 = sphi 0, %s49
    %s64 = sphi 0, %s50
    %s68 = sphi 0, %s68
    %s70 = sphi 0, %s68
    %s71 = sphi 0, %s70
    %s85 = sphi 0, %s71
    %s89 = sphi 0, %s89
    %s91 = sphi 0, %s89
    %s92 = sphi 0, %s91
    %s106 = sphi 0, %s92
    %s110 = sphi 0, %s110
    %s112 = sphi 0, %s110
    %s113 = sphi 0, %s112
    %s127 = sphi 0, %s113
    %s131 = sphi 0, %s131
    %s133 = sphi 0, %s131
    %s134 = sphi 0, %s133
    %s148 = sphi 0, %s134
    %s152 = sphi 0, %s152
    %s154 = sphi 0, %s152
    %s155 = sphi 0, %s154
    %s169 = sphi 0, %s155
    %s175 = sphi 0, %s177
    %s178 = sphi 0, %s175
    %s179 = sphi 0, %s178
    %s195 = sphi 0, %s179
  $region4: #{neural_network_forward.1} parent=0 // loop_header_branch
    %16 = sbr.rel (%p14) target = $region8
  $region5: #{neural_network_forward.1} parent=0 // loop_body
    %s18 = ssub.s32 %s13, 1
    %s19 = ssub.s32 %s13, 2
    %s20 = sadd.s32 %s13, 1
    %s21 = ssub.s32 %s13, %s20
    %p22 = scmp.eq.s32.totalorder %s21, 0
    %s24 = sadd.s32 %s23, 1
    %s25 = scalar_select %p22, %s23, %s24
    %p28 = pneg %p22
    %p29 = scmp.eq.s32.totalorder %s13, 3
    %p30 = por %p28, %p29
    %p31 = scmp.ne.s32.totalorder %s23, %s26
    %p32 = scmp.eq.s32.totalorder %s13, 0
    %p33 = por %p31, %p32
    %p34 = scmp.ne.s32.totalorder %s23, %s26
    %p35 = scmp.eq.s32.totalorder %s18, 3
    %p36 = por %p34, %p35
    %p37 = scmp.ne.s32.totalorder %s26, %s27
    %p38 = scmp.eq.s32.totalorder %s18, 0
    %p39 = por %p37, %p38
    %p40 = scmp.ne.s32.totalorder %s26, %s27
    %p41 = scmp.eq.s32.totalorder %s19, 3
    %p42 = por %p40, %p41
    %p44 = scmp.ne.s32.totalorder %s27, %s43
    %p45 = scmp.eq.s32.totalorder %s19, 0
    %p46 = por %p44, %p45
    %s48 = sadd.s32 %s47, 1
    %p51 = scmp.eq.s32.totalorder %s13, 3
    %p52 = scmp.ne.s32.totalorder %s47, %s49
    %p53 = scmp.eq.s32.totalorder %s13, 0
    %p54 = por %p52, %p53
    %p55 = scmp.ne.s32.totalorder %s47, %s49
    %p56 = scmp.eq.s32.totalorder %s18, 3
    %p57 = por %p55, %p56
    %p58 = scmp.ne.s32.totalorder %s49, %s50
    %p59 = scmp.eq.s32.totalorder %s18, 0
    %p60 = por %p58, %p59
    %p61 = scmp.ne.s32.totalorder %s49, %s50
    %p62 = scmp.eq.s32.totalorder %s19, 3
    %p63 = por %p61, %p62
    %p65 = scmp.ne.s32.totalorder %s50, %s64
    %p66 = scmp.eq.s32.totalorder %s19, 0
    %p67 = por %p65, %p66
    %s69 = sadd.s32 %s68, 1
    %p72 = scmp.eq.s32.totalorder %s13, 3
    %p73 = scmp.ne.s32.totalorder %s68, %s70
    %p74 = scmp.eq.s32.totalorder %s13, 0
    %p75 = por %p73, %p74
    %p76 = scmp.ne.s32.totalorder %s68, %s70
    %p77 = scmp.eq.s32.totalorder %s18, 3
    %p78 = por %p76, %p77
    %p79 = scmp.ne.s32.totalorder %s70, %s71
    %p80 = scmp.eq.s32.totalorder %s18, 0
    %p81 = por %p79, %p80
    %p82 = scmp.ne.s32.totalorder %s70, %s71
    %p83 = scmp.eq.s32.totalorder %s19, 3
    %p84 = por %p82, %p83
    %p86 = scmp.ne.s32.totalorder %s71, %s85
    %p87 = scmp.eq.s32.totalorder %s19, 0
    %p88 = por %p86, %p87
    %s90 = sadd.s32 %s89, 1
    %p93 = scmp.eq.s32.totalorder %s13, 3
    %p94 = scmp.ne.s32.totalorder %s89, %s91
    %p95 = scmp.eq.s32.totalorder %s13, 0
    %p96 = por %p94, %p95
    %p97 = scmp.ne.s32.totalorder %s89, %s91
    %p98 = scmp.eq.s32.totalorder %s18, 3
    %p99 = por %p97, %p98
    %p100 = scmp.ne.s32.totalorder %s91, %s92
    %p101 = scmp.eq.s32.totalorder %s18, 0
    %p102 = por %p100, %p101
    %p103 = scmp.ne.s32.totalorder %s91, %s92
    %p104 = scmp.eq.s32.totalorder %s19, 3
    %p105 = por %p103, %p104
    %p107 = scmp.ne.s32.totalorder %s92, %s106
    %p108 = scmp.eq.s32.totalorder %s19, 0
    %p109 = por %p107, %p108
    %s111 = sadd.s32 %s110, 1
    %p114 = scmp.eq.s32.totalorder %s13, 3
    %p115 = scmp.ne.s32.totalorder %s110, %s112
    %p116 = scmp.eq.s32.totalorder %s13, 0
    %p117 = por %p115, %p116
    %p118 = scmp.ne.s32.totalorder %s110, %s112
    %p119 = scmp.eq.s32.totalorder %s18, 3
    %p120 = por %p118, %p119
    %p121 = scmp.ne.s32.totalorder %s112, %s113
    %p122 = scmp.eq.s32.totalorder %s18, 0
    %p123 = por %p121, %p122
    %p124 = scmp.ne.s32.totalorder %s112, %s113
    %p125 = scmp.eq.s32.totalorder %s19, 3
    %p126 = por %p124, %p125
    %p128 = scmp.ne.s32.totalorder %s113, %s127
    %p129 = scmp.eq.s32.totalorder %s19, 0
    %p130 = por %p128, %p129
    %s132 = sadd.s32 %s131, 1
    %p135 = scmp.eq.s32.totalorder %s13, 3
    %p136 = scmp.ne.s32.totalorder %s131, %s133
    %p137 = scmp.eq.s32.totalorder %s13, 0
    %p138 = por %p136, %p137
    %p139 = scmp.ne.s32.totalorder %s131, %s133
    %p140 = scmp.eq.s32.totalorder %s18, 3
    %p141 = por %p139, %p140
    %p142 = scmp.ne.s32.totalorder %s133, %s134
    %p143 = scmp.eq.s32.totalorder %s18, 0
    %p144 = por %p142, %p143
    %p145 = scmp.ne.s32.totalorder %s133, %s134
    %p146 = scmp.eq.s32.totalorder %s19, 3
    %p147 = por %p145, %p146
    %p149 = scmp.ne.s32.totalorder %s134, %s148
    %p150 = scmp.eq.s32.totalorder %s19, 0
    %p151 = por %p149, %p150
    %s153 = sadd.s32 %s152, 1
    %p156 = scmp.eq.s32.totalorder %s13, 3
    %p157 = scmp.ne.s32.totalorder %s152, %s154
    %p158 = scmp.eq.s32.totalorder %s13, 0
    %p159 = por %p157, %p158
    %p160 = scmp.ne.s32.totalorder %s152, %s154
    %p161 = scmp.eq.s32.totalorder %s18, 3
    %p162 = por %p160, %p161
    %p163 = scmp.ne.s32.totalorder %s154, %s155
    %p164 = scmp.eq.s32.totalorder %s18, 0
    %p165 = por %p163, %p164
    %p166 = scmp.ne.s32.totalorder %s154, %s155
    %p167 = scmp.eq.s32.totalorder %s19, 3
    %p168 = por %p166, %p167
    %p170 = scmp.ne.s32.totalorder %s155, %s169
    %p171 = scmp.eq.s32.totalorder %s19, 0
    %p172 = por %p170, %p171
    %s173 = ssub.s32 %s13, %s20
    %p174 = scmp.eq.s32.totalorder %s173, 0
    %s176 = sadd.s32 %s175, 1
    %s177 = scalar_select %p174, %s175, %s176
    %p180 = pneg %p174
    %p181 = scmp.eq.s32.totalorder %s13, 3
    %p182 = por %p180, %p181
    %p183 = scmp.ne.s32.totalorder %s175, %s178
    %p184 = scmp.eq.s32.totalorder %s13, 0
    %p185 = por %p183, %p184
    %p186 = scmp.ne.s32.totalorder %s175, %s178
    %p187 = scmp.eq.s32.totalorder %s18, 3
    %p188 = por %p186, %p187
    %p189 = scmp.ne.s32.totalorder %s178, %s179
    %p190 = scmp.eq.s32.totalorder %s18, 0
    %p191 = por %p189, %p190
    %p192 = scmp.ne.s32.totalorder %s178, %s179
    %p193 = scmp.eq.s32.totalorder %s19, 3
    %p194 = por %p192, %p193
    %p196 = scmp.ne.s32.totalorder %s179, %s195
    %p197 = scmp.eq.s32.totalorder %s19, 0
    %p198 = por %p196, %p197
    %p199 = scmp.le.s32.totalorder 1, %s13
    %p200 = scmp.lt.s32.totalorder %s13, 5
    %p201 = pnand %p199, %p200
    %p202 = pneg %p201
    // Predicated region
    $region9: #{neural_network_forward.1} parent=5 // pred_check
      _
    $region10: #{neural_network_forward.1} parent=5 // pred_check_branch
      %204 = sbr.rel (%p201) target = $region12
    $region11: #{neural_network_forward.1} parent=5 // pred_region
      %s205 = ssub.s32 %s13, 1
      // Predicated region
      $region13: #{neural_network_forward.1} parent=11 // pred_check
        %p206 = pneg %p60
      $region14: #{neural_network_forward.1} parent=11 // pred_check_branch
        %208 = sbr.rel (%p206) target = $region16
      $region15: #{neural_network_forward.1} parent=11 // pred_region
        _
      $region16: #{neural_network_forward.1} parent=11 // pred_fallthru
        _
      // Predicated region
      $region17: #{neural_network_forward.1} parent=11 // pred_check
        %p209 = pneg %p81
      $region18: #{neural_network_forward.1} parent=11 // pred_check_branch
        %211 = sbr.rel (%p209) target = $region20
      $region19: #{neural_network_forward.1} parent=11 // pred_region
        _
      $region20: #{neural_network_forward.1} parent=11 // pred_fallthru
        _
      // Predicated region
      $region21: #{neural_network_forward.1} parent=11 // pred_check
        %p212 = pneg %p102
      $region22: #{neural_network_forward.1} parent=11 // pred_check_branch
        %214 = sbr.rel (%p212) target = $region24
      $region23: #{neural_network_forward.1} parent=11 // pred_region
        _
      $region24: #{neural_network_forward.1} parent=11 // pred_fallthru
        _
      // Predicated region
      $region25: #{neural_network_forward.1} parent=11 // pred_check
        %p215 = pneg %p123
      $region26: #{neural_network_forward.1} parent=11 // pred_check_branch
        %217 = sbr.rel (%p215) target = $region28
      $region27: #{neural_network_forward.1} parent=11 // pred_region
        _
      $region28: #{neural_network_forward.1} parent=11 // pred_fallthru
        _
      // Predicated region
      $region29: #{neural_network_forward.1} parent=11 // pred_check
        %p218 = pneg %p144
      $region30: #{neural_network_forward.1} parent=11 // pred_check_branch
        %220 = sbr.rel (%p218) target = $region32
      $region31: #{neural_network_forward.1} parent=11 // pred_region
        _
      $region32: #{neural_network_forward.1} parent=11 // pred_fallthru
        _
      // Predicated region
      $region33: #{neural_network_forward.1} parent=11 // pred_check
        %p221 = pneg %p165
      $region34: #{neural_network_forward.1} parent=11 // pred_check_branch
        %223 = sbr.rel (%p221) target = $region36
      $region35: #{neural_network_forward.1} parent=11 // pred_region
        _
      $region36: #{neural_network_forward.1} parent=11 // pred_fallthru
        _
    $region12: #{neural_network_forward.1} parent=5 // pred_fallthru
      _
    %p224 = scmp.lt.s32.totalorder %s13, 4
    // Predicated region
    $region37: #{neural_network_forward.1} parent=5 // pred_check
      %p225 = pneg %p224
    $region38: #{neural_network_forward.1} parent=5 // pred_check_branch
      %227 = sbr.rel (%p225) target = $region40
    $region39: #{neural_network_forward.1} parent=5 // pred_region
      // Predicated region
      $region41: #{neural_network_forward.1} parent=39 // pred_check
        %p228 = pneg %p33
      $region42: #{neural_network_forward.1} parent=39 // pred_check_branch
        %230 = sbr.rel (%p228) target = $region44
      $region43: #{neural_network_forward.1} parent=39 // pred_region
        %s231 = smul.u32 2, %s13
        %p232 = scmp.lt.s32.totalorder %s231, 7
        %s233 = scalar_select %p232, %s231, 7
        %s234 = smul.addr %s233, 8
        %s235 = scalar_lea.vmem %s0, %s234
        %s236 = smul.u32 2, %s13
      $region44: #{neural_network_forward.1} parent=39 // pred_fallthru
        _
    $region40: #{neural_network_forward.1} parent=5 // pred_fallthru
      _
    %p237 = scmp.le.s32.totalorder 1, %s13
    %p238 = scmp.lt.s32.totalorder %s13, 5
    %p239 = pnand %p237, %p238
    %p240 = pneg %p239
    // Predicated region
    $region45: #{neural_network_forward.1} parent=5 // pred_check
      _
    $region46: #{neural_network_forward.1} parent=5 // pred_check_branch
      %242 = sbr.rel (%p239) target = $region48
    $region47: #{neural_network_forward.1} parent=5 // pred_region
      %s243 = ssub.s32 %s13, 1
      %s244 = smul.u32 2, %s18
      %p245 = scmp.lt.s32.totalorder %s244, 7
      %s246 = scalar_select %p245, %s244, 7
      %s247 = smul.addr %s246, 8
      %s248 = scalar_lea.vmem %s0, %s247
      %p249 = pneg %p39
      %p250 = pneg %p36
      %p251 = pneg %p60
      %p252 = pneg %p57
      %p253 = pneg %p81
      %p254 = pneg %p78
      %p255 = pneg %p102
      %p256 = pneg %p99
      %p257 = pneg %p123
      %p258 = pneg %p120
      %p259 = pneg %p144
      %p260 = pneg %p141
      %p261 = pneg %p165
      %p262 = pneg %p162
      %p263 = pneg %p191
      %p264 = pneg %p188
      %s265 = smul.u32 2, %s18
      %p266 = scmp.lt.s32.totalorder %s265, 7
      %s267 = scalar_select %p266, %s265, 7
      %s268 = smul.addr %s267, 8
      %s269 = scalar_lea.vmem %s7, %s268
      %s270 = smul.u32 2, %s18
      %p271 = scmp.lt.s32.totalorder %s270, 7
      %s272 = scalar_select %p271, %s270, 7
      %s273 = smul.addr %s272, 8
      %s274 = scalar_lea.vmem %s0, %s273
      %s275 = smul.u32 2, %s18
      %s276 = smul.u32 2, %s18
      %p277 = scmp.lt.s32.totalorder %s276, 7
      %s278 = scalar_select %p277, %s276, 7
      %s279 = smul.addr %s278, 8
      %s280 = scalar_lea.vmem %s7, %s279
      %s281 = smul.u32 2, %s18
      %v283 = vld [vmem:[%s274] sm:$0xff]
      %v284 = vld [vmem:[%s274 + $0x8] sm:$0xff]
      %v285 = vpack.c.bf16 %v284, %v283
      %v286 = vld [vmem:[%s1] sm:$0xf]
      %v287 = vld [vmem:[%s1 + $0x4] sm:$0xf]
      %v288 = vld [vmem:[%s2] sm:$0x1]
      %v290 = vperm.slane %v288, 0
      %v294 = vunpack.c.l.b16 %v286
      %v295 = vunpack.c.l.b16 %v287
      %v296 = vpack.c.b16 %v295, %v294
      %vm298 = vcmask 130048
      %v300 = vsel %vm298, %v285, 0
      %302 = vmatpush.bf16.msra.mxu0 0
      %303 = vmatpush.bf16.msra.mxu0 0
      %304 = vmatpush.bf16.msra.mxu0 0
      %305 = vmatpush.bf16.msra.mxu0 0
      %306 = vmatpush.bf16.msra.mxu0 0
      %307 = vmatpush.bf16.msra.mxu0 0
      %308 = vmatpush.bf16.msra.mxu0 0
      %309 = vmatpush.bf16.msra.mxu0 %v296
      %310 = vmatmul.bf16.gmra.mxu0 %v300
      %v311 = vpop.f32.mrf.mxu0
      %v312 = vadd.f32 %v290, %v311
      %v313 = vpop.f32.mrf.mxu0
      %v314 = vadd.f32 %v290, %v313
      %315 = vdwg.mxu0
      %v316 = vmax.f32 %v312, 0.0
      %v317 = vmax.f32 %v314, 0.0
      %v318 = vpack.c.bf16 %v317, %v316
      %v319 = vld [vmem:[%s3] sm:$0xf]
      %v320 = vld [vmem:[%s3 + $0x4] sm:$0xf]
      %v321 = vld [vmem:[%s3 + $0x8] sm:$0xf]
      %v322 = vld [vmem:[%s3 + $0xc] sm:$0xf]
      %v323 = vld [vmem:[%s3 + $0x10] sm:$0xf]
      %v324 = vld [vmem:[%s3 + $0x14] sm:$0xf]
      %v325 = vld [vmem:[%s3 + $0x18] sm:$0xf]
      %v326 = vld [vmem:[%s3 + $0x1c] sm:$0xf]
      %v327 = vld [vmem:[%s4] sm:$0x1]
      %v329 = vperm.slane %v327, 0
      %v339 = vunpack.c.l.b16 %v319
      %v340 = vunpack.c.l.b16 %v320
      %v341 = vunpack.c.l.b16 %v321
      %v342 = vunpack.c.l.b16 %v322
      %v343 = vunpack.c.l.b16 %v323
      %v344 = vunpack.c.l.b16 %v324
      %v345 = vunpack.c.l.b16 %v325
      %v346 = vunpack.c.l.b16 %v326
      %v347 = vpack.c.b16 %v340, %v339
      %v348 = vpack.c.b16 %v342, %v341
      %v349 = vpack.c.b16 %v344, %v343
      %v350 = vpack.c.b16 %v346, %v345
      %vm355 = vcmask 523264
      %v357 = vsel %vm355, %v318, 0
      %359 = vmatpush.bf16.msra.mxu0 0
      %360 = vmatpush.bf16.msra.mxu0 0
      %361 = vmatpush.bf16.msra.mxu0 0
      %362 = vmatpush.bf16.msra.mxu0 0
      %363 = vmatpush.bf16.msra.mxu0 %v350
      %364 = vmatpush.bf16.msra.mxu0 %v349
      %365 = vmatpush.bf16.msra.mxu0 %v348
      %366 = vmatpush.bf16.msra.mxu0 %v347
      %367 = vmatmul.bf16.gmra.mxu0 %v357
      %v368 = vpop.f32.mrf.mxu0
      %v369 = vadd.f32 %v329, %v368
      %v370 = vpop.f32.mrf.mxu0
      %v371 = vadd.f32 %v329, %v370
      %372 = vdwg.mxu0
      %v373 = vmax.f32 %v369, 0.0
      %v374 = vmax.f32 %v371, 0.0
      %v375 = vpack.c.bf16 %v374, %v373
      %v376 = vld [vmem:[%s5] sm:$0xf]
      %v377 = vld [vmem:[%s5 + $0x4] sm:$0xf]
      %v378 = vld [vmem:[%s5 + $0x8] sm:$0xf]
      %v379 = vld [vmem:[%s5 + $0xc] sm:$0xf]
      %v380 = vld [vmem:[%s6] sm:$0x1]
      %v382 = vperm.slane %v380, 0
      %v388 = vunpack.c.l.b16 %v376
      %v389 = vunpack.c.l.b16 %v377
      %v390 = vunpack.c.l.b16 %v378
      %v391 = vunpack.c.l.b16 %v379
      %v392 = vpack.c.b16 %v389, %v388
      %v393 = vpack.c.b16 %v391, %v390
      %vm396 = vcmask 261120
      %v398 = vsel %vm396, %v375, 0
      %400 = vmatpush.bf16.msra.mxu0 0
      %401 = vmatpush.bf16.msra.mxu0 0
      %402 = vmatpush.bf16.msra.mxu0 0
      %403 = vmatpush.bf16.msra.mxu0 0
      %404 = vmatpush.bf16.msra.mxu0 0
      %405 = vmatpush.bf16.msra.mxu0 0
      %406 = vmatpush.bf16.msra.mxu0 %v393
      %407 = vmatpush.bf16.msra.mxu0 %v392
      %408 = vmatmul.bf16.gmra.mxu0 %v398
      %v409 = vpop.f32.mrf.mxu0
      %v410 = vadd.f32 %v382, %v409
      %v411 = vpop.f32.mrf.mxu0
      %v412 = vadd.f32 %v382, %v411
      %413 = vdwg.mxu0
      %vm414 = vcmask 31744
      %415 = vst.msk [vmem:[%s280] sm:$0xff] %vm414, %v410
      %416 = vst.msk [vmem:[%s280 + $0x8] sm:$0xff] %vm414, %v412
      %s417 = smul.u32 2, %s18
      %p418 = scmp.lt.s32.totalorder %s417, 7
      %s419 = scalar_select %p418, %s417, 7
      %s420 = smul.addr %s419, 8
      %s421 = scalar_lea.vmem %s7, %s420
      // Predicated region
      $region49: #{neural_network_forward.1} parent=47 // pred_check
        %p422 = pneg %p188
      $region50: #{neural_network_forward.1} parent=47 // pred_check_branch
        %424 = sbr.rel (%p422) target = $region52
      $region51: #{neural_network_forward.1} parent=47 // pred_region
        %s425 = smul.u32 2, %s18
      $region52: #{neural_network_forward.1} parent=47 // pred_fallthru
        _
    $region48: #{neural_network_forward.1} parent=5 // pred_fallthru
      _
    %p426 = scmp.le.s32.totalorder 2, %s13
    // Predicated region
    $region53: #{neural_network_forward.1} parent=5 // pred_check
      %p427 = pneg %p426
    $region54: #{neural_network_forward.1} parent=5 // pred_check_branch
      %429 = sbr.rel (%p427) target = $region56
    $region55: #{neural_network_forward.1} parent=5 // pred_region
      %s430 = ssub.s32 %s13, 2
      // Predicated region
      $region57: #{neural_network_forward.1} parent=55 // pred_check
        %p431 = pneg %p194
      $region58: #{neural_network_forward.1} parent=55 // pred_check_branch
        %433 = sbr.rel (%p431) target = $region60
      $region59: #{neural_network_forward.1} parent=55 // pred_region
        %s434 = smul.u32 2, %s19
        %p435 = scmp.lt.s32.totalorder %s434, 7
        %s436 = scalar_select %p435, %s434, 7
        %s437 = smul.addr %s436, 8
        %s438 = scalar_lea.vmem %s7, %s437
      $region60: #{neural_network_forward.1} parent=55 // pred_fallthru
        _
    $region56: #{neural_network_forward.1} parent=5 // pred_fallthru
      _
  $region6: #{neural_network_forward.1} parent=0 // loop_footer
    %s17 = sadd.s32 1, %s13
  $region7: #{neural_network_forward.1} parent=0 // loop_footer_branch
    %12 = sbr.rel target = $region3
  $region8: #{neural_network_forward.1} parent=0 // loop_exit
    _

</llo_original>
